<compile_context>
chip_gen: v7x
topology: tpu7x:2x2x1
jax: 0.10.0
libtpu: 0.0.40
codegen_flags: <defaults>
</compile_context>

<pallas_src>
import jax
import jax.numpy as jnp
from jax.experimental import pallas as pl
from jax.experimental.pallas import tpu as pltpu


# ----------------------------------------------------------------------------
# Fused Pallas kernel: patch projection + (single-table) embedding lookups +
# sum over sub-token axis + concat, whole batch in one grid step.
# ----------------------------------------------------------------------------

def _make_fused_kernel(batch, num_patches, patch_dim, seq_len, n_idx, vtot):
    """All sizes baked in as Python constants."""
    B, P, L = batch, num_patches, seq_len
    BL = B * L

    def kernel(patch_ref, idx_ref, wb_ref, tab_ref, out_ref):
        # ---- image patch projection: Linear(patch_dim -> E), bias = last row of wb
        img = jnp.dot(patch_ref[...], wb_ref[0:patch_dim, :],
                      preferred_element_type=jnp.float32)
        img = img + wb_ref[patch_dim:patch_dim + 1, :]            # (B*P, E)
        # nn.Dropout(project_dropout): identity in eval/deterministic mode.

        # ---- text embeddings: ONE combined multi-hot, ONE table matmul ----
        # iota hoisted out of the index loop (built once, reused K+2 times).
        iota = jax.lax.broadcasted_iota(jnp.int32, (BL, vtot), 1)
        multi = (iota == idx_ref[0]).astype(jnp.float32)
        for c in range(1, n_idx):                                 # static unroll, tiny
            multi = multi + (iota == idx_ref[c]).astype(jnp.float32)
        text = jnp.dot(multi, tab_ref[...],
                       preferred_element_type=jnp.float32)        # (B*L, E)

        # ---- fused "concatenate": per batch, image rows then text rows ----
        for b in range(B):                                        # static unroll
            base = b * (P + L)
            out_ref[base:base + P, :] = img[b * P:(b + 1) * P, :]
            out_ref[base + P:base + P + L, :] = text[b * L:(b + 1) * L, :]

    return kernel


# ----------------------------------------------------------------------------
# Wrapper: single pallas_call for the whole TransformerPretrain embedding stage
# ----------------------------------------------------------------------------

def rearrange_patches(x, p):
    """'b c (h p1) (w p2) -> b (h w) (p1 p2 c)' for NCHW input (tiny XLA glue)."""
    B, C, H, W = x.shape
    h, w = H // p, W // p
    x = x.reshape(B, C, h, p, w, p)
    x = jnp.transpose(x, (0, 2, 4, 3, 5, 1))        # (B, h, w, p1, p2, C)
    return x.reshape(B, h * w, p * p * C)


def pretrain_embed(params, cfg, diagram_src, token, class_tag, sect_tag):
    """Returns the concatenated (img_emb ++ text_emb_src) sequence: (B, P+L, E)."""
    B, C, H, W = diagram_src.shape
    p = cfg.img_patch_size
    P = (H // p) * (W // p)
    E = cfg.encoder_embedding_size
    patch_dim = C * p * p
    _, K, L = token.shape
    VTOT = params["emb_table"].shape[0]

    # einops rearrange stays as XLA glue (tiny tensor).
    patches = rearrange_patches(diagram_src, p).reshape(B * P, patch_dim)

    # Pack token / (offset) class / (offset) sect indices into ONE int32 block:
    # (K+2, B*L, 1).  Offsets map class/sect ids into the combined table.
    tok_idx = jnp.transpose(token, (1, 0, 2)).reshape(K, B * L)
    cls_idx = (class_tag + params["cls_offset"]).reshape(1, B * L)
    sect_idx = (sect_tag + params["sect_offset"]).reshape(1, B * L)
    idx = jnp.concatenate([tok_idx, cls_idx, sect_idx], axis=0
                          ).astype(jnp.int32)[..., None]          # (K+2, B*L, 1)

    kernel = _make_fused_kernel(B, P, patch_dim, L, K + 2, VTOT)

    out = pl.pallas_call(
        kernel,
        out_shape=jax.ShapeDtypeStruct((B * (P + L), E), jnp.float32),
        grid=(1,),                                   # single fat step (B is tiny)
        in_specs=[
            pl.BlockSpec((B * P, patch_dim), lambda i: (0, 0)),      # patches
            pl.BlockSpec((K + 2, B * L, 1), lambda i: (0, 0, 0)),    # packed indices
            pl.BlockSpec((patch_dim + 1, E), lambda i: (0, 0)),      # patch W | bias
            pl.BlockSpec((VTOT, E), lambda i: (0, 0)),               # combined table
        ],
        out_specs=pl.BlockSpec((B * (P + L), E), lambda i: (0, 0)),
        compiler_params=pltpu.CompilerParams(
            # single step -> nothing to split across cores; keep it arbitrary.
            dimension_semantics=("arbitrary",),
        ),
    )(patches, idx, params["patch_wb"], params["emb_table"])

    return out.reshape(B, P + L, E)


# ----------------------------------------------------------------------------
# Model (parameters + forward)
# ----------------------------------------------------------------------------

class Cfg:
    diagram_size = 16
    img_patch_size = 4
    encoder_embedding_size = 32
    project_type = "linear"
    project_dropout = 0.0     # identity in eval / deterministic mode
    decoder_layers = 2
    use_pretrain = True
    pretrain_emb_path = ""
    pretrain_path = ""


def _round_up(x, m):
    return (x + m - 1) // m * m


def init_params(key, cfg, vocab_size, n_class_tag, n_sect_tag, channels=3):
    E = cfg.encoder_embedding_size
    patch_dim = channels * cfg.img_patch_size * cfg.img_patch_size
    k = jax.random.split(key, 4)

    patch_w = 0.02 * jax.random.normal(k[0], (patch_dim, E), jnp.float32)
    patch_b = jnp.zeros((E,), jnp.float32)

    def make_table(kk, n_rows):
        n_pad = _round_up(n_rows, 8)          # sublane-pad once at init; pad rows zero
        t = jnp.zeros((n_pad, E), jnp.float32)
        t = t.at[:n_rows].set(0.02 * jax.random.normal(kk, (n_rows, E), jnp.float32))
        return t.at[0].set(0.0)               # nn.Embedding(padding_idx=0)

    tok = make_table(k[1], vocab_size)
    cls = make_table(k[2], n_class_tag)
    sect = make_table(k[3], n_sect_tag)

    return {
        # bias folded in as last weight row -> one fewer kernel input
        "patch_wb": jnp.concatenate([patch_w, patch_b[None, :]], axis=0),
        # ONE combined embedding table (tok ++ cls ++ sect), one matmul in-kernel
        "emb_table": jnp.concatenate([tok, cls, sect], axis=0),
        "cls_offset": tok.shape[0],
        "sect_offset": tok.shape[0] + cls.shape[0],
    }


def network_forward(params, cfg, diagram_src, text_dict, var_dict):
    B, C, H, W = diagram_src.shape
    p = cfg.img_patch_size
    num_patches = (H // p) * (W // p)

    # Fused: patch linear + token/class/sect embedding lookups + sum over
    # sub-token axis + concat, in one Pallas kernel / one grid step.
    all_emb_src = pretrain_embed(params, cfg, diagram_src,
                                 text_dict["token"],
                                 text_dict["class_tag"],
                                 text_dict["sect_tag"])

    len_comb = text_dict["len"] + num_patches
    var_pos_comb = var_dict["pos"] + num_patches

    # TODO(synk): TransformerEncoder / encoder / fusioner / decoder sources are
    # not provided upstream; return the combined embedding sequence they consume.
    return all_emb_src, len_comb, var_pos_comb


# Pure-JAX reference for correctness checking (same params).
def reference_embed(params, cfg, diagram_src, text_dict):
    p = cfg.img_patch_size
    patches = rearrange_patches(diagram_src, p)
    w = params["patch_wb"][:-1]
    b = params["patch_wb"][-1]
    img = jnp.einsum("bpd,de->bpe", patches, w,
                     precision=jax.lax.Precision.HIGHEST) + b
    tab = params["emb_table"]
    tok = jnp.take(tab, text_dict["token"], axis=0).sum(axis=1)
    cls = jnp.take(tab, text_dict["class_tag"] + params["cls_offset"], axis=0)
    sect = jnp.take(tab, text_dict["sect_tag"] + params["sect_offset"], axis=0)
    return jnp.concatenate([img, tok + cls + sect], axis=1)


# ----------------------------------------------------------------------------
# main
# ----------------------------------------------------------------------------

if __name__ == "__main__":
    cfg = Cfg()
    key = jax.random.PRNGKey(0)
    k_par, k_img, k_tok, k_cls, k_sect, k_pos = jax.random.split(key, 6)

    B, C = 2, 3
    L = 8           # text sequence length
    K_SUB = 3       # sub-tokens per position (summed over dim=1)
    VOCAB, N_CLASS, N_SECT = 50, 6, 6

    params = init_params(k_par, cfg, VOCAB, N_CLASS, N_SECT, channels=C)

    diagram_src = jax.random.normal(
        k_img, (B, C, cfg.diagram_size, cfg.diagram_size), jnp.float32)
    text_dict = {
        "token": jax.random.randint(k_tok, (B, K_SUB, L), 0, VOCAB, jnp.int32),
        "class_tag": jax.random.randint(k_cls, (B, L), 0, N_CLASS, jnp.int32),
        "sect_tag": jax.random.randint(k_sect, (B, L), 0, N_SECT, jnp.int32),
        "len": jnp.array([L, L - 2], jnp.int32),
    }
    var_dict = {
        "pos": jax.random.randint(k_pos, (B, 4), 0, L, jnp.int32),
        "len": jnp.array([4, 3], jnp.int32),
    }

    all_emb_src, len_comb, var_pos_comb = network_forward(
        params, cfg, diagram_src, text_dict, var_dict)
    jax.block_until_ready((all_emb_src, len_comb, var_pos_comb))

    num_patches = (cfg.diagram_size // cfg.img_patch_size) ** 2
    assert all_emb_src.shape == (B, num_patches + L, cfg.encoder_embedding_size)
    assert len_comb.shape == (B,) and var_pos_comb.shape == (B, 4)

    ref = reference_embed(params, cfg, diagram_src, text_dict)
    assert jnp.allclose(all_emb_src, ref, atol=2e-3, rtol=2e-3), "mismatch vs reference"

    print("KERNEL_OK")
</pallas_src>

<mosaic_0001>
module attributes {stable_mosaic.version = 11 : i64} {
  func.func @kernel(%arg0: i32, %arg1: memref<32x48xf32, #tpu.memory_space<vmem>>, %arg2: memref<5x16x1xi32, #tpu.memory_space<vmem>>, %arg3: memref<49x32xf32, #tpu.memory_space<vmem>>, %arg4: memref<72x32xf32, #tpu.memory_space<vmem>>, %arg5: memref<48x32xf32, #tpu.memory_space<vmem>>) attributes {dimension_semantics = [#tpu.dimension_semantics<arbitrary>], iteration_bounds = array<i64: 1>, scalar_prefetch = 0 : i64, scratch_operands = 0 : i64, tpu.core_type = #tpu.core_type<tc>, window_params = [{pipeline_mode = #tpu.pipeline_mode<synchronous>, transform_indices = @transform_0, window_bounds = array<i64: 32, 48>}, {pipeline_mode = #tpu.pipeline_mode<synchronous>, transform_indices = @transform_1, window_bounds = array<i64: 5, 16, 1>}, {pipeline_mode = #tpu.pipeline_mode<synchronous>, transform_indices = @transform_2, window_bounds = array<i64: 49, 32>}, {pipeline_mode = #tpu.pipeline_mode<synchronous>, transform_indices = @transform_3, window_bounds = array<i64: 72, 32>}, {pipeline_mode = #tpu.pipeline_mode<synchronous>, transform_indices = @transform_4, window_bounds = array<i64: 48, 32>}]} {
    %c0 = arith.constant 0 : index
    %c0_0 = arith.constant 0 : index
    %0 = vector.load %arg1[%c0, %c0_0] : memref<32x48xf32, #tpu.memory_space<vmem>>, vector<32x48xf32>
    %c0_1 = arith.constant 0 : index
    %c0_2 = arith.constant 0 : index
    %1 = vector.load %arg3[%c0_1, %c0_2] : memref<49x32xf32, #tpu.memory_space<vmem>>, vector<48x32xf32>
    %cst = arith.constant dense<0.000000e+00> : vector<32x32xf32>
    %2 = tpu.matmul %0, %1, %cst {dimension_numbers = #tpu.dot_dimension_numbers<[1], [0], [0], [1], [0, 0, 1, 1], [], []>} : vector<32x48xf32>, vector<48x32xf32>, vector<32x32xf32> -> vector<32x32xf32>
    %c48 = arith.constant 48 : index
    %c0_3 = arith.constant 0 : index
    %3 = vector.load %arg3[%c48, %c0_3] : memref<49x32xf32, #tpu.memory_space<vmem>>, vector<1x32xf32>
    %4 = vector.broadcast %3 : vector<1x32xf32> to vector<32x32xf32>
    %5 = arith.addf %2, %4 : vector<32x32xf32>
    %6 = tpu.iota {dimensions = array<i32: 1>} : vector<16x72xi32>
    %c0_4 = arith.constant 0 : index
    %c0_5 = arith.constant 0 : index
    %c0_6 = arith.constant 0 : index
    %7 = vector.load %arg2[%c0_4, %c0_5, %c0_6] : memref<5x16x1xi32, #tpu.memory_space<vmem>>, vector<1x16x1xi32>
    %8 = vector.shape_cast %7 : vector<1x16x1xi32> to vector<16x1xi32>
    %9 = vector.broadcast %8 : vector<16x1xi32> to vector<16x72xi32>
    %10 = arith.cmpi eq, %6, %9 : vector<16x72xi32>
    %11 = arith.extui %10 : vector<16x72xi1> to vector<16x72xi32>
    %12 = arith.sitofp %11 : vector<16x72xi32> to vector<16x72xf32>
    %c1 = arith.constant 1 : index
    %c0_7 = arith.constant 0 : index
    %c0_8 = arith.constant 0 : index
    %13 = vector.load %arg2[%c1, %c0_7, %c0_8] : memref<5x16x1xi32, #tpu.memory_space<vmem>>, vector<1x16x1xi32>
    %14 = vector.shape_cast %13 : vector<1x16x1xi32> to vector<16x1xi32>
    %15 = vector.broadcast %14 : vector<16x1xi32> to vector<16x72xi32>
    %16 = arith.cmpi eq, %6, %15 : vector<16x72xi32>
    %17 = arith.extui %16 : vector<16x72xi1> to vector<16x72xi32>
    %18 = arith.sitofp %17 : vector<16x72xi32> to vector<16x72xf32>
    %19 = arith.addf %12, %18 : vector<16x72xf32>
    %c2 = arith.constant 2 : index
    %c0_9 = arith.constant 0 : index
    %c0_10 = arith.constant 0 : index
    %20 = vector.load %arg2[%c2, %c0_9, %c0_10] : memref<5x16x1xi32, #tpu.memory_space<vmem>>, vector<1x16x1xi32>
    %21 = vector.shape_cast %20 : vector<1x16x1xi32> to vector<16x1xi32>
    %22 = vector.broadcast %21 : vector<16x1xi32> to vector<16x72xi32>
    %23 = arith.cmpi eq, %6, %22 : vector<16x72xi32>
    %24 = arith.extui %23 : vector<16x72xi1> to vector<16x72xi32>
    %25 = arith.sitofp %24 : vector<16x72xi32> to vector<16x72xf32>
    %26 = arith.addf %19, %25 : vector<16x72xf32>
    %c3 = arith.constant 3 : index
    %c0_11 = arith.constant 0 : index
    %c0_12 = arith.constant 0 : index
    %27 = vector.load %arg2[%c3, %c0_11, %c0_12] : memref<5x16x1xi32, #tpu.memory_space<vmem>>, vector<1x16x1xi32>
    %28 = vector.shape_cast %27 : vector<1x16x1xi32> to vector<16x1xi32>
    %29 = vector.broadcast %28 : vector<16x1xi32> to vector<16x72xi32>
    %30 = arith.cmpi eq, %6, %29 : vector<16x72xi32>
    %31 = arith.extui %30 : vector<16x72xi1> to vector<16x72xi32>
    %32 = arith.sitofp %31 : vector<16x72xi32> to vector<16x72xf32>
    %33 = arith.addf %26, %32 : vector<16x72xf32>
    %c4 = arith.constant 4 : index
    %c0_13 = arith.constant 0 : index
    %c0_14 = arith.constant 0 : index
    %34 = vector.load %arg2[%c4, %c0_13, %c0_14] : memref<5x16x1xi32, #tpu.memory_space<vmem>>, vector<1x16x1xi32>
    %35 = vector.shape_cast %34 : vector<1x16x1xi32> to vector<16x1xi32>
    %36 = vector.broadcast %35 : vector<16x1xi32> to vector<16x72xi32>
    %37 = arith.cmpi eq, %6, %36 : vector<16x72xi32>
    %38 = arith.extui %37 : vector<16x72xi1> to vector<16x72xi32>
    %39 = arith.sitofp %38 : vector<16x72xi32> to vector<16x72xf32>
    %40 = arith.addf %33, %39 : vector<16x72xf32>
    %c0_15 = arith.constant 0 : index
    %c0_16 = arith.constant 0 : index
    %41 = vector.load %arg4[%c0_15, %c0_16] : memref<72x32xf32, #tpu.memory_space<vmem>>, vector<72x32xf32>
    %cst_17 = arith.constant dense<0.000000e+00> : vector<16x32xf32>
    %42 = tpu.matmul %40, %41, %cst_17 {dimension_numbers = #tpu.dot_dimension_numbers<[1], [0], [0], [1], [0, 0, 1, 1], [], []>} : vector<16x72xf32>, vector<72x32xf32>, vector<16x32xf32> -> vector<16x32xf32>
    %43 = vector.extract_strided_slice %5 {offsets = [0, 0], sizes = [16, 32], strides = [1, 1]} : vector<32x32xf32> to vector<16x32xf32>
    %c0_18 = arith.constant 0 : index
    %c0_19 = arith.constant 0 : index
    %44 = vector.load %arg5[%c0_18, %c0_19] : memref<48x32xf32, #tpu.memory_space<vmem>>, vector<16x32xf32>
    tpu.vector_store %arg5[%c0_18, %c0_19], %43 {strides = array<i32>} : memref<48x32xf32, #tpu.memory_space<vmem>>, vector<16x32xf32>,
    %45 = vector.extract_strided_slice %42 {offsets = [0, 0], sizes = [8, 32], strides = [1, 1]} : vector<16x32xf32> to vector<8x32xf32>
    %c16 = arith.constant 16 : index
    %c0_20 = arith.constant 0 : index
    %46 = vector.load %arg5[%c16, %c0_20] : memref<48x32xf32, #tpu.memory_space<vmem>>, vector<8x32xf32>
    tpu.vector_store %arg5[%c16, %c0_20], %45 {strides = array<i32>} : memref<48x32xf32, #tpu.memory_space<vmem>>, vector<8x32xf32>,
    %47 = vector.extract_strided_slice %5 {offsets = [16, 0], sizes = [16, 32], strides = [1, 1]} : vector<32x32xf32> to vector<16x32xf32>
    %c24 = arith.constant 24 : index
    %c0_21 = arith.constant 0 : index
    %48 = vector.load %arg5[%c24, %c0_21] : memref<48x32xf32, #tpu.memory_space<vmem>>, vector<16x32xf32>
    tpu.vector_store %arg5[%c24, %c0_21], %47 {strides = array<i32>} : memref<48x32xf32, #tpu.memory_space<vmem>>, vector<16x32xf32>,
    %49 = vector.extract_strided_slice %42 {offsets = [8, 0], sizes = [8, 32], strides = [1, 1]} : vector<16x32xf32> to vector<8x32xf32>
    %c40 = arith.constant 40 : index
    %c0_22 = arith.constant 0 : index
    %50 = vector.load %arg5[%c40, %c0_22] : memref<48x32xf32, #tpu.memory_space<vmem>>, vector<8x32xf32>
    tpu.vector_store %arg5[%c40, %c0_22], %49 {strides = array<i32>} : memref<48x32xf32, #tpu.memory_space<vmem>>, vector<8x32xf32>,
    return
  }
  func.func @transform_0(%arg0: i32) -> (i32, i32) {
    %c0_i32 = arith.constant 0 : i32
    %c0_i32_0 = arith.constant 0 : i32
    %c0_i32_1 = arith.constant 0 : i32
    return %c0_i32, %c0_i32_0 : i32, i32
  }
  func.func @transform_1(%arg0: i32) -> (i32, i32, i32) {
    %c0_i32 = arith.constant 0 : i32
    %c0_i32_0 = arith.constant 0 : i32
    %c0_i32_1 = arith.constant 0 : i32
    %c0_i32_2 = arith.constant 0 : i32
    return %c0_i32, %c0_i32_0, %c0_i32_1 : i32, i32, i32
  }
  func.func @transform_2(%arg0: i32) -> (i32, i32) {
    %c0_i32 = arith.constant 0 : i32
    %c0_i32_0 = arith.constant 0 : i32
    %c0_i32_1 = arith.constant 0 : i32
    return %c0_i32, %c0_i32_0 : i32, i32
  }
  func.func @transform_3(%arg0: i32) -> (i32, i32) {
    %c0_i32 = arith.constant 0 : i32
    %c0_i32_0 = arith.constant 0 : i32
    %c0_i32_1 = arith.constant 0 : i32
    return %c0_i32, %c0_i32_0 : i32, i32
  }
  func.func @transform_4(%arg0: i32) -> (i32, i32) {
    %c0_i32 = arith.constant 0 : i32
    %c0_i32_0 = arith.constant 0 : i32
    %c0_i32_1 = arith.constant 0 : i32
    return %c0_i32, %c0_i32_0 : i32, i32
  }
}

</mosaic_0001>

<llo_original>
// kernel: tpu_custom_call.1
$region0: #{tpu_custom_call.1}
  #allocation0 [shape = 'u32[]', space=smem, size = 0x4, offset = 0x4, fixed_abs, tag = 'smem constant byte address 0x4 - core index']
  #allocation1 [shape = 'u32[144,128]{1,0:T(1,128)}', space=vmem, size = 0x12000, scoped, tag = 'internal scratch']
  %s0 = inlined_call_operand.vmem [shape: f32[32,48], index: 0, kind: input, shape index: {}]
  %s1 = inlined_call_operand.vmem [shape: s32[5,16,1], index: 1, kind: input, shape index: {}]
  %s2 = inlined_call_operand.vmem [shape: f32[49,32], index: 2, kind: input, shape index: {}]
  %s3 = inlined_call_operand.vmem [shape: f32[72,32], index: 3, kind: input, shape index: {}]
  %s4 = inlined_call_operand.vmem [shape: f32[48,32], index: 4, kind: output, shape index: {}]
  %s5 = sld [smem:[#allocation0]]
  $region26: #{tpu_custom_call.1} parent=0
    _
  %s7 = ssub.s32 1, %s5
  %s8 = scalar_select 0, %s7, %s5
  // Predicated region
  $region2: #{tpu_custom_call.1} parent=0 // pred_check
    _
  $region3: #{tpu_custom_call.1} parent=0 // pred_check_branch
    %10 = sbr.rel (0) target = $region5
  $region4: #{tpu_custom_call.1} parent=0 // pred_region
    _
  $region5: #{tpu_custom_call.1} parent=0 // pred_fallthru
    _
  // Predicated region
  $region6: #{tpu_custom_call.1} parent=0 // pred_check
    _
  $region7: #{tpu_custom_call.1} parent=0 // pred_check_branch
    %12 = sbr.rel (0) target = $region9
  $region8: #{tpu_custom_call.1} parent=0 // pred_region
    _
  $region9: #{tpu_custom_call.1} parent=0 // pred_fallthru
    _
  // Predicated region
  $region10: #{tpu_custom_call.1} parent=0 // pred_check
    _
  $region11: #{tpu_custom_call.1} parent=0 // pred_check_branch
    %14 = sbr.rel (0) target = $region13
  $region12: #{tpu_custom_call.1} parent=0 // pred_region
    _
  $region13: #{tpu_custom_call.1} parent=0 // pred_fallthru
    _
  // Predicated region
  $region14: #{tpu_custom_call.1} parent=0 // pred_check
    _
  $region15: #{tpu_custom_call.1} parent=0 // pred_check_branch
    %16 = sbr.rel (0) target = $region17
  $region16: #{tpu_custom_call.1} parent=0 // pred_region
    _
  $region17: #{tpu_custom_call.1} parent=0 // pred_fallthru
    _
  %v17 = vld [vmem:[%s0] sm:$0xff]
  %v18 = vld [vmem:[%s0 + $0x8] sm:$0xff]
  %v19 = vld [vmem:[%s0 + $0x10] sm:$0xff]
  %v20 = vld [vmem:[%s0 + $0x18] sm:$0xff]
  %v21 = vld [vmem:[%s2] sm:$0xff]
  %v22 = vld [vmem:[%s2 + $0x8] sm:$0xff]
  %v23 = vld [vmem:[%s2 + $0x10] sm:$0xff]
  %v24 = vld [vmem:[%s2 + $0x18] sm:$0xff]
  %v25 = vld [vmem:[%s2 + $0x20] sm:$0xff]
  %v26 = vld [vmem:[%s2 + $0x28] sm:$0xff]
  %v27 = vld [vmem:[%s2 + $0x30] sm:$0x1]
  %v28 = vlaneseq
  %v29 = vshrl.u32 %v28, 7
  %v30 = vsub.s32 0, %v29
  %v31 = vrot.slane %v27, %v30
  %vm32 = vcmask 392192
  %v34 = vsel %vm32, %v17, 0
  %v37 = vsel %vm32, %v18, 0
  %v40 = vsel %vm32, %v19, 0
  %v43 = vsel %vm32, %v20, 0
  %45 = vmatprep.subr.mxu0 0.0
  %46 = vmatpush1.msra.mxu0 %v21
  %47 = vmatprep.subr.mxu0 0.0
  %48 = vmatpush1.msra.mxu0 %v22
  %49 = vmatprep.subr.mxu0 0.0
  %50 = vmatpush1.msra.mxu0 %v23
  %51 = vmatprep.subr.mxu0 0.0
  %52 = vmatpush1.msra.mxu0 %v24
  %53 = vmatprep.subr.mxu0 0.0
  %54 = vmatpush1.msra.mxu0 %v25
  %55 = vmatprep.subr.mxu0 0.0
  %56 = vmatpush1.msra.mxu0 %v26
  %57 = vmatprep.subr.mxu0 0.0
  %58 = vmatpush1.msra.mxu0 0.0
  %59 = vmatprep.subr.mxu0 0.0
  %60 = vmatpush1.msra.mxu0 0.0
  %61 = vmatprep.subr.mxu0 0.0
  %62 = vmatpush1.msra.mxu0 0.0
  %63 = vmatprep.subr.mxu0 0.0
  %64 = vmatpush1.msra.mxu0 0.0
  %65 = vmatprep.subr.mxu0 0.0
  %66 = vmatpush1.msra.mxu0 0.0
  %67 = vmatprep.subr.mxu0 0.0
  %68 = vmatpush1.msra.mxu0 0.0
  %69 = vmatprep.subr.mxu0 0.0
  %70 = vmatpush1.msra.mxu0 0.0
  %71 = vmatprep.subr.mxu0 0.0
  %72 = vmatpush1.msra.mxu0 0.0
  %73 = vmatprep.subr.mxu0 0.0
  %74 = vmatpush1.msra.mxu0 0.0
  %75 = vmatprep.subr.mxu0 0.0
  %76 = vmatpush1.msra.mxu0 0.0
  %77 = vmatprep.subr.mxu0 0.0
  %78 = vmatpush1.msra.mxu0 0.0
  %79 = vmatprep.subr.mxu0 0.0
  %80 = vmatpush1.msra.mxu0 0.0
  %81 = vmatprep.subr.mxu0 0.0
  %82 = vmatpush1.msra.mxu0 0.0
  %83 = vmatprep.subr.mxu0 0.0
  %84 = vmatpush1.msra.mxu0 0.0
  %85 = vmatprep.subr.mxu0 0.0
  %86 = vmatpush1.msra.mxu0 0.0
  %87 = vmatprep.subr.mxu0 0.0
  %88 = vmatpush1.msra.mxu0 0.0
  %89 = vmatprep.subr.mxu0 0.0
  %90 = vmatpush1.msra.mxu0 0.0
  %91 = vmatprep.subr.mxu0 0.0
  %92 = vmatpush1.msra.mxu0 0.0
  %93 = vmatprep.subr.mxu0 0.0
  %94 = vmatpush1.msra.mxu0 0.0
  %95 = vmatprep.subr.mxu0 0.0
  %96 = vmatpush1.msra.mxu0 0.0
  %97 = vmatprep.subr.mxu0 0.0
  %98 = vmatpush1.msra.mxu0 0.0
  %99 = vmatprep.subr.mxu0 0.0
  %100 = vmatpush1.msra.mxu0 0.0
  %101 = vmatprep.subr.mxu0 0.0
  %102 = vmatpush1.msra.mxu0 0.0
  %103 = vmatprep.subr.mxu0 0.0
  %104 = vmatpush1.msra.mxu0 0.0
  %105 = vmatprep.subr.mxu0 0.0
  %106 = vmatpush1.msra.mxu0 0.0
  %107 = vmatprep.subr.mxu0 0.0
  %108 = vmatpush1.msra.mxu0 0.0
  %109 = vmatprep.mubr.f32.mxu0 0.0
  %110 = vmatmul.mubr.f32.gmra.mrb[0].mxu0 %v34
  %v111 = vpop.f32.mrb[0].mxu0
  %v112 = vadd.f32 %v31, %v111
  %v113 = vpop.f32.mrb[0].mxu0
  %114 = vmatprep.mubr.f32.mxu0 0.0
  %115 = vmatmul.mubr.f32.gmra.mrb[0].mxu0 %v37
  %v116 = vpop.f32.mrb[0].mxu0
  %v117 = vadd.f32 %v31, %v116
  %v118 = vpop.f32.mrb[0].mxu0
  %119 = vmatprep.mubr.f32.mxu0 0.0
  %120 = vmatmul.mubr.f32.gmra.mrb[0].mxu0 %v40
  %v121 = vpop.f32.mrb[0].mxu0
  %v122 = vadd.f32 %v31, %v121
  %v123 = vpop.f32.mrb[0].mxu0
  %124 = vmatprep.mubr.f32.mxu0 0.0
  %125 = vmatmul.mubr.f32.gmra.mrb[0].mxu0 %v43
  %v126 = vpop.f32.mrb[0].mxu0
  %v127 = vadd.f32 %v31, %v126
  %v128 = vpop.f32.mrb[0].mxu0
  %129 = vdwg.mxu0
  %v130 = vlaneseq
  %v131 = vand.u32 %v130, 127
  %v132 = vld [vmem:[%s1] sm:$0xff]
  %v133 = vld [vmem:[%s1 + $0x8] sm:$0xff]
  %134 = vset.pattern.permute.xlu0 0
  %135 = vperm.xlu0 %134, %v132
  %v136 = vpop.permute.xlu0 %135
  %137 = vset.pattern.permute.xlu0 0
  %138 = vperm.xlu0 %137, %v133
  %v139 = vpop.permute.xlu0 %138
  %vm140 = vcmp.eq.s32.totalorder %v131, %v136
  %vm141 = vcmp.eq.s32.totalorder %v131, %v139
  %v142 = vsel %vm140, 1, 0
  %v143 = vsel %vm141, 1, 0
  %v144 = vcvt.s32.f32 %v142
  %v145 = vcvt.s32.f32 %v143
  %s146 = scalar_lea.vmem %s1, 16
  %v147 = vld [vmem:[%s146] sm:$0xff]
  %v148 = vld [vmem:[%s146 + $0x8] sm:$0xff]
  %149 = vset.pattern.permute.xlu0 0
  %150 = vperm.xlu0 %149, %v147
  %v151 = vpop.permute.xlu0 %150
  %152 = vset.pattern.permute.xlu0 0
  %153 = vperm.xlu0 %152, %v148
  %v154 = vpop.permute.xlu0 %153
  %vm155 = vcmp.eq.s32.totalorder %v131, %v151
  %vm156 = vcmp.eq.s32.totalorder %v131, %v154
  %v157 = vsel %vm155, 1, 0
  %v158 = vsel %vm156, 1, 0
  %v159 = vcvt.s32.f32 %v157
  %v160 = vcvt.s32.f32 %v158
  %v161 = vadd.f32 %v144, %v159
  %v162 = vadd.f32 %v145, %v160
  %s163 = scalar_lea.vmem %s1, 32
  %v164 = vld [vmem:[%s163] sm:$0xff]
  %v165 = vld [vmem:[%s163 + $0x8] sm:$0xff]
  %166 = vset.pattern.permute.xlu0 0
  %167 = vperm.xlu0 %166, %v164
  %v168 = vpop.permute.xlu0 %167
  %169 = vset.pattern.permute.xlu0 0
  %170 = vperm.xlu0 %169, %v165
  %v171 = vpop.permute.xlu0 %170
  %vm172 = vcmp.eq.s32.totalorder %v131, %v168
  %vm173 = vcmp.eq.s32.totalorder %v131, %v171
  %v174 = vsel %vm172, 1, 0
  %v175 = vsel %vm173, 1, 0
  %v176 = vcvt.s32.f32 %v174
  %v177 = vcvt.s32.f32 %v175
  %v178 = vadd.f32 %v161, %v176
  %v179 = vadd.f32 %v162, %v177
  %s180 = scalar_lea.vmem %s1, 48
  %v181 = vld [vmem:[%s180] sm:$0xff]
  %v182 = vld [vmem:[%s180 + $0x8] sm:$0xff]
  %183 = vset.pattern.permute.xlu0 0
  %184 = vperm.xlu0 %183, %v181
  %v185 = vpop.permute.xlu0 %184
  %186 = vset.pattern.permute.xlu0 0
  %187 = vperm.xlu0 %186, %v182
  %v188 = vpop.permute.xlu0 %187
  %vm189 = vcmp.eq.s32.totalorder %v131, %v185
  %vm190 = vcmp.eq.s32.totalorder %v131, %v188
  %v191 = vsel %vm189, 1, 0
  %v192 = vsel %vm190, 1, 0
  %v193 = vcvt.s32.f32 %v191
  %v194 = vcvt.s32.f32 %v192
  %v195 = vadd.f32 %v178, %v193
  %v196 = vadd.f32 %v179, %v194
  %s197 = scalar_lea.vmem %s1, 64
  %v198 = vld [vmem:[%s197] sm:$0xff]
  %v199 = vld [vmem:[%s197 + $0x8] sm:$0xff]
  %200 = vset.pattern.permute.xlu0 0
  %201 = vperm.xlu0 %200, %v198
  %v202 = vpop.permute.xlu0 %201
  %203 = vset.pattern.permute.xlu0 0
  %204 = vperm.xlu0 %203, %v199
  %v205 = vpop.permute.xlu0 %204
  %vm206 = vcmp.eq.s32.totalorder %v131, %v202
  %vm207 = vcmp.eq.s32.totalorder %v131, %v205
  %v208 = vsel %vm206, 1, 0
  %v209 = vsel %vm207, 1, 0
  %v210 = vcvt.s32.f32 %v208
  %v211 = vcvt.s32.f32 %v209
  %v212 = vadd.f32 %v195, %v210
  %v213 = vadd.f32 %v196, %v211
  %v214 = vld [vmem:[%s3] sm:$0xff]
  %v215 = vld [vmem:[%s3 + $0x8] sm:$0xff]
  %v216 = vld [vmem:[%s3 + $0x10] sm:$0xff]
  %v217 = vld [vmem:[%s3 + $0x18] sm:$0xff]
  %v218 = vld [vmem:[%s3 + $0x20] sm:$0xff]
  %v219 = vld [vmem:[%s3 + $0x28] sm:$0xff]
  %v220 = vld [vmem:[%s3 + $0x30] sm:$0xff]
  %v221 = vld [vmem:[%s3 + $0x38] sm:$0xff]
  %v222 = vld [vmem:[%s3 + $0x40] sm:$0xff]
  %vm223 = vcmask 588800
  %v225 = vsel %vm223, %v212, 0
  %v228 = vsel %vm223, %v213, 0
  %230 = vmatprep.subr.mxu0 0.0
  %231 = vmatpush1.msra.mxu0 %v214
  %232 = vmatprep.subr.mxu0 0.0
  %233 = vmatpush1.msra.mxu0 %v215
  %234 = vmatprep.subr.mxu0 0.0
  %235 = vmatpush1.msra.mxu0 %v216
  %236 = vmatprep.subr.mxu0 0.0
  %237 = vmatpush1.msra.mxu0 %v217
  %238 = vmatprep.subr.mxu0 0.0
  %239 = vmatpush1.msra.mxu0 %v218
  %240 = vmatprep.subr.mxu0 0.0
  %241 = vmatpush1.msra.mxu0 %v219
  %242 = vmatprep.subr.mxu0 0.0
  %243 = vmatpush1.msra.mxu0 %v220
  %244 = vmatprep.subr.mxu0 0.0
  %245 = vmatpush1.msra.mxu0 %v221
  %246 = vmatprep.subr.mxu0 0.0
  %247 = vmatpush1.msra.mxu0 %v222
  %248 = vmatprep.subr.mxu0 0.0
  %249 = vmatpush1.msra.mxu0 0.0
  %250 = vmatprep.subr.mxu0 0.0
  %251 = vmatpush1.msra.mxu0 0.0
  %252 = vmatprep.subr.mxu0 0.0
  %253 = vmatpush1.msra.mxu0 0.0
  %254 = vmatprep.subr.mxu0 0.0
  %255 = vmatpush1.msra.mxu0 0.0
  %256 = vmatprep.subr.mxu0 0.0
  %257 = vmatpush1.msra.mxu0 0.0
  %258 = vmatprep.subr.mxu0 0.0
  %259 = vmatpush1.msra.mxu0 0.0
  %260 = vmatprep.subr.mxu0 0.0
  %261 = vmatpush1.msra.mxu0 0.0
  %262 = vmatprep.subr.mxu0 0.0
  %263 = vmatpush1.msra.mxu0 0.0
  %264 = vmatprep.subr.mxu0 0.0
  %265 = vmatpush1.msra.mxu0 0.0
  %266 = vmatprep.subr.mxu0 0.0
  %267 = vmatpush1.msra.mxu0 0.0
  %268 = vmatprep.subr.mxu0 0.0
  %269 = vmatpush1.msra.mxu0 0.0
  %270 = vmatprep.subr.mxu0 0.0
  %271 = vmatpush1.msra.mxu0 0.0
  %272 = vmatprep.subr.mxu0 0.0
  %273 = vmatpush1.msra.mxu0 0.0
  %274 = vmatprep.subr.mxu0 0.0
  %275 = vmatpush1.msra.mxu0 0.0
  %276 = vmatprep.subr.mxu0 0.0
  %277 = vmatpush1.msra.mxu0 0.0
  %278 = vmatprep.subr.mxu0 0.0
  %279 = vmatpush1.msra.mxu0 0.0
  %280 = vmatprep.subr.mxu0 0.0
  %281 = vmatpush1.msra.mxu0 0.0
  %282 = vmatprep.subr.mxu0 0.0
  %283 = vmatpush1.msra.mxu0 0.0
  %284 = vmatprep.subr.mxu0 0.0
  %285 = vmatpush1.msra.mxu0 0.0
  %286 = vmatprep.subr.mxu0 0.0
  %287 = vmatpush1.msra.mxu0 0.0
  %288 = vmatprep.subr.mxu0 0.0
  %289 = vmatpush1.msra.mxu0 0.0
  %290 = vmatprep.subr.mxu0 0.0
  %291 = vmatpush1.msra.mxu0 0.0
  %292 = vmatprep.subr.mxu0 0.0
  %293 = vmatpush1.msra.mxu0 0.0
  %294 = vmatprep.mubr.f32.mxu0 0.0
  %295 = vmatmul.mubr.f32.gmra.mrb[0].mxu0 %v225
  %v296 = vpop.f32.mrb[0].mxu0
  %v297 = vadd.f32 0.0, %v296
  %v298 = vpop.f32.mrb[0].mxu0
  %299 = vmatprep.mubr.f32.mxu0 0.0
  %300 = vmatmul.mubr.f32.gmra.mrb[0].mxu0 %v228
  %v301 = vpop.f32.mrb[0].mxu0
  %v302 = vadd.f32 0.0, %v301
  %v303 = vpop.f32.mrb[0].mxu0
  %304 = vdwg.mxu0
  %vm305 = vcmask 261120
  %306 = vst.msk [vmem:[%s4] sm:$0xff] %vm305, %v112
  %307 = vst.msk [vmem:[%s4 + $0x8] sm:$0xff] %vm305, %v117
  %308 = vst.msk [vmem:[%s4 + $0x10] sm:$0xff] %vm305, %v297
  %309 = vst.msk [vmem:[%s4 + $0x18] sm:$0xff] %vm305, %v122
  %310 = vst.msk [vmem:[%s4 + $0x20] sm:$0xff] %vm305, %v127
  %311 = vst.msk [vmem:[%s4 + $0x28] sm:$0xff] %vm305, %v302
  // Predicated region
  $region18: #{tpu_custom_call.1} parent=0 // pred_check
    _
  $region19: #{tpu_custom_call.1} parent=0 // pred_check_branch
    %313 = sbr.rel (0) target = $region21
  $region20: #{tpu_custom_call.1} parent=0 // pred_region
    _
  $region21: #{tpu_custom_call.1} parent=0 // pred_fallthru
    _
  // Predicated region
  $region22: #{tpu_custom_call.1} parent=0 // pred_check
    _
  $region23: #{tpu_custom_call.1} parent=0 // pred_check_branch
    %315 = sbr.rel (0) target = $region25
  $region24: #{tpu_custom_call.1} parent=0 // pred_region
    _
  $region25: #{tpu_custom_call.1} parent=0 // pred_fallthru
    _

</llo_original>
